<compile_context>
chip_gen: v7x
topology: tpu7x:2x2x1
jax: 0.10.0
libtpu: 0.0.40
codegen_flags: <defaults>
</compile_context>

<pallas_src>
import functools
import math

import jax
import jax.numpy as jnp
from jax import lax
from jax.experimental import pallas as pl
from jax.experimental.pallas import tpu as pltpu


def _label_smoothing_kernel(x_ref, tgt_ref, out_ref, acc_ref, *, padding_idx,
                            confidence, smooth_val, row_const):
    i = pl.program_id(0)

    @pl.when(i == 0)
    def _init():
        acc_ref[...] = jnp.zeros_like(acc_ref)

    x = x_ref[...].astype(jnp.float32)          # (TN, V); upcast right after load (v5e-safe)
    tgt = tgt_ref[...]                           # (TN, 1) int32
    tn, v = x.shape

    col = lax.broadcasted_iota(jnp.int32, (tn, v), 1)
    # Weights of the smoothed target distribution (padding column handled below).
    w = jnp.where(col == tgt, jnp.float32(confidence), jnp.float32(smooth_val))
    dot_row = jnp.sum(w * x, axis=-1, keepdims=True)         # (TN, 1) lane reduce
    x_pad = x[:, padding_idx:padding_idx + 1]                 # (TN, 1) static lane slice

    # loss_row = sum_j t_j*(log t_j - x_j)
    #          = row_const - confidence*x[tgt] - smooth_val*(sum(x) - x[tgt] - x[pad])
    #          = row_const - dot_row + smooth_val*x_pad     (rows with tgt != padding_idx)
    loss_row = jnp.float32(row_const) - dot_row + jnp.float32(smooth_val) * x_pad
    loss_row = jnp.where(tgt != padding_idx, loss_row, jnp.float32(0.0))

    acc_ref[...] += loss_row

    @pl.when(i == pl.num_programs(0) - 1)
    def _finalize():
        out_ref[...] = jnp.sum(acc_ref[...], keepdims=True)


def label_smoothing_loss(x, target, *, padding_idx, smoothing, row_tile=512):
    """Pallas equivalent of LabelSmoothing.forward(x, target) -> scalar float32."""
    n, v = x.shape
    assert v > 2, "size must be > 2 (module divides by size - 2)"
    confidence = 1.0 - smoothing
    smooth_val = smoothing / (v - 2)
    # Compile-time entropy term sum_j t_j*log(t_j) for a non-padding row (0*log0 := 0).
    row_const = 0.0
    if confidence > 0.0:
        row_const += confidence * math.log(confidence)
    if smooth_val > 0.0:
        row_const += (v - 2) * smooth_val * math.log(smooth_val)

    itemsize = jnp.dtype(x.dtype).itemsize
    # Cap the x block at ~8 MiB per buffer (double-buffered => ~16 MiB; v7x-safe).
    vmem_buffer_bytes = 8 * 1024 * 1024
    max_rows = max(8, (vmem_buffer_bytes // (v * itemsize)) // 8 * 8)
    rows_rounded = max(8, -(-n // 8) * 8)
    row_tile = int(min(row_tile, max_rows, rows_rounded))
    row_tile = max(8, row_tile - row_tile % 8)

    # Pad rows to a multiple of row_tile; padded rows use target == padding_idx and
    # therefore contribute exactly zero to the loss.
    n_pad = -(-n // row_tile) * row_tile
    if n_pad != n:
        x = jnp.pad(x, ((0, n_pad - n), (0, 0)))
        target = jnp.pad(target, (0, n_pad - n), constant_values=padding_idx)
    tgt2d = target.reshape(n_pad, 1).astype(jnp.int32)

    kernel = functools.partial(
        _label_smoothing_kernel,
        padding_idx=int(padding_idx),
        confidence=float(confidence),
        smooth_val=float(smooth_val),
        row_const=float(row_const),
    )

    # TODO(synk): for production vocab sizes (V >= 32K) add an inner 'arbitrary' grid
    # axis over the vocab dim (compare against global column index = tile_off + iota,
    # keep the smoothing/(V-2) global denominator) so both block dims stay large
    # without blowing the per-generation VMEM budget.
    out = pl.pallas_call(
        kernel,
        out_shape=jax.ShapeDtypeStruct((1, 1), jnp.float32),
        grid_spec=pltpu.PrefetchScalarGridSpec(
            num_scalar_prefetch=0,
            grid=(n_pad // row_tile,),
            in_specs=[
                pl.BlockSpec((row_tile, v), lambda i: (i, 0)),
                pl.BlockSpec((row_tile, 1), lambda i: (i, 0)),
            ],
            out_specs=pl.BlockSpec((1, 1), lambda i: (0, 0)),
            scratch_shapes=[pltpu.VMEM((row_tile, 1), jnp.float32)],
        ),
        compiler_params=pltpu.CompilerParams(
            dimension_semantics=("arbitrary",),  # output accumulator is grid-resident
            vmem_limit_bytes=32 * 1024 * 1024,
        ),
    )(x, tgt2d)
    return out[0, 0]


def _reference_loss(x, target, *, padding_idx, smoothing):
    """Pure-JAX reference mirroring the PyTorch module exactly."""
    n, v = x.shape
    x = x.astype(jnp.float32)
    confidence = 1.0 - smoothing
    true_dist = jnp.full((n, v), smoothing / (v - 2), dtype=jnp.float32)
    one_hot = jax.nn.one_hot(target, v, dtype=bool)
    true_dist = jnp.where(one_hot, confidence, true_dist)
    true_dist = true_dist.at[:, padding_idx].set(0.0)
    true_dist = jnp.where((target != padding_idx)[:, None], true_dist, 0.0)
    term = jnp.where(true_dist > 0,
                     true_dist * (jnp.log(jnp.where(true_dist > 0, true_dist, 1.0)) - x),
                     0.0)
    return jnp.sum(term)


if __name__ == "__main__":
    # size (vocab) = 128, padding_idx = 0, smoothing = 0.1, N = 16 token rows.
    size = 128
    padding_idx = 0
    smoothing = 0.1
    n = 16

    key = jax.random.PRNGKey(0)
    k1, k2 = jax.random.split(key)
    logits = jax.random.normal(k1, (n, size), dtype=jnp.float32)
    x = jax.nn.log_softmax(logits, axis=-1)  # KLDivLoss expects log-probabilities
    target = jax.random.randint(k2, (n,), 0, size, dtype=jnp.int32)
    # ensure some rows hit the padding-index path
    target = target.at[3].set(padding_idx).at[11].set(padding_idx)

    loss = label_smoothing_loss(x, target, padding_idx=padding_idx, smoothing=smoothing)
    loss = jax.block_until_ready(loss)

    ref = _reference_loss(x, target, padding_idx=padding_idx, smoothing=smoothing)
    assert jnp.allclose(loss, ref, rtol=1e-4, atol=1e-4), (loss, ref)

    print("KERNEL_OK")
</pallas_src>

<mosaic_0001>
module attributes {stable_mosaic.version = 11 : i64} {
  func.func @_label_smoothing_kernel(%arg0: i32, %arg1: memref<16x128xf32, #tpu.memory_space<vmem>>, %arg2: memref<16x1xi32, #tpu.memory_space<vmem>>, %arg3: memref<1x1xf32, #tpu.memory_space<vmem>>, %arg4: memref<16x1xf32, #tpu.memory_space<vmem>>) attributes {dimension_semantics = [#tpu.dimension_semantics<arbitrary>], iteration_bounds = array<i64: 1>, scalar_prefetch = 0 : i64, scratch_operands = 1 : i64, tpu.core_type = #tpu.core_type<tc>, window_params = [{transform_indices = @transform_0, window_bounds = array<i64: 16, 128>}, {transform_indices = @transform_1, window_bounds = array<i64: 16, 1>}, {pipeline_mode = #tpu.pipeline_mode<synchronous>, transform_indices = @transform_2, window_bounds = array<i64: 1, 1>}]} {
    %c0_i32 = arith.constant 0 : i32
    %0 = arith.cmpi eq, %arg0, %c0_i32 : i32
    %1 = arith.extui %0 : i1 to i32
    %c0_i32_0 = arith.constant 0 : i32
    %2 = arith.cmpi ne, %1, %c0_i32_0 : i32
    scf.if %2 {
      %cst_16 = arith.constant 0.000000e+00 : f32
      %30 = vector.broadcast %cst_16 : f32 to vector<16x1xf32>
      %c0_17 = arith.constant 0 : index
      %c0_18 = arith.constant 0 : index
      %31 = vector.load %arg4[%c0_17, %c0_18] : memref<16x1xf32, #tpu.memory_space<vmem>>, vector<16x1xf32>
      tpu.vector_store %arg4[%c0_17, %c0_18], %30 {strides = array<i32>} : memref<16x1xf32, #tpu.memory_space<vmem>>, vector<16x1xf32>,
    } else {
    }
    %c0 = arith.constant 0 : index
    %c0_1 = arith.constant 0 : index
    %3 = vector.load %arg1[%c0, %c0_1] : memref<16x128xf32, #tpu.memory_space<vmem>>, vector<16x128xf32>
    %c0_2 = arith.constant 0 : index
    %c0_3 = arith.constant 0 : index
    %4 = vector.load %arg2[%c0_2, %c0_3] : memref<16x1xi32, #tpu.memory_space<vmem>>, vector<16x1xi32>
    %5 = tpu.iota {dimensions = array<i32: 1>} : vector<16x128xi32>
    %6 = vector.broadcast %4 : vector<16x1xi32> to vector<16x128xi32>
    %7 = arith.cmpi eq, %5, %6 : vector<16x128xi32>
    %cst = arith.constant 0.899999976 : f32
    %cst_4 = arith.constant 7.93650805E-4 : f32
    %8 = vector.broadcast %cst : f32 to vector<16x128xf32>
    %9 = vector.broadcast %cst_4 : f32 to vector<16x128xf32>
    %10 = arith.select %7, %8, %9 : vector<16x128xi1>, vector<16x128xf32>
    %11 = arith.mulf %10, %3 : vector<16x128xf32>
    %cst_5 = arith.constant dense<0.000000e+00> : vector<16xf32>
    %12 = vector.multi_reduction <add>, %11, %cst_5 [1] : vector<16x128xf32> to vector<16xf32>
    %13 = vector.shape_cast %12 : vector<16xf32> to vector<16x1xf32>
    %14 = vector.extract_strided_slice %3 {offsets = [0, 0], sizes = [16, 1], strides = [1, 1]} : vector<16x128xf32> to vector<16x1xf32>
    %cst_6 = arith.constant -0.808711171 : f32
    %15 = vector.broadcast %cst_6 : f32 to vector<16x1xf32>
    %16 = arith.subf %15, %13 : vector<16x1xf32>
    %cst_7 = arith.constant 7.93650805E-4 : f32
    %17 = vector.broadcast %cst_7 : f32 to vector<16x1xf32>
    %18 = arith.mulf %17, %14 : vector<16x1xf32>
    %19 = arith.addf %16, %18 : vector<16x1xf32>
    %c0_i32_8 = arith.constant 0 : i32
    %20 = vector.broadcast %c0_i32_8 : i32 to vector<16x1xi32>
    %21 = arith.cmpi ne, %4, %20 : vector<16x1xi32>
    %cst_9 = arith.constant 0.000000e+00 : f32
    %22 = vector.broadcast %cst_9 : f32 to vector<16x1xf32>
    %23 = arith.select %21, %19, %22 : vector<16x1xi1>, vector<16x1xf32>
    %c0_10 = arith.constant 0 : index
    %c0_11 = arith.constant 0 : index
    %24 = vector.load %arg4[%c0_10, %c0_11] : memref<16x1xf32, #tpu.memory_space<vmem>>, vector<16x1xf32>
    %25 = arith.addf %24, %23 : vector<16x1xf32>
    %c0_12 = arith.constant 0 : index
    %c0_13 = arith.constant 0 : index
    %26 = vector.load %arg4[%c0_12, %c0_13] : memref<16x1xf32, #tpu.memory_space<vmem>>, vector<16x1xf32>
    tpu.vector_store %arg4[%c0_12, %c0_13], %25 {strides = array<i32>} : memref<16x1xf32, #tpu.memory_space<vmem>>, vector<16x1xf32>,
    %c0_i32_14 = arith.constant 0 : i32
    %27 = arith.cmpi eq, %arg0, %c0_i32_14 : i32
    %28 = arith.extui %27 : i1 to i32
    %c0_i32_15 = arith.constant 0 : i32
    %29 = arith.cmpi ne, %28, %c0_i32_15 : i32
    scf.if %29 {
      %c0_16 = arith.constant 0 : index
      %c0_17 = arith.constant 0 : index
      %30 = vector.load %arg4[%c0_16, %c0_17] : memref<16x1xf32, #tpu.memory_space<vmem>>, vector<16x1xf32>
      %31 = vector.shape_cast %30 : vector<16x1xf32> to vector<1x16x1xf32>
      %cst_18 = arith.constant dense<0.000000e+00> : vector<1xf32>
      %32 = vector.multi_reduction <add>, %31, %cst_18 [1, 2] : vector<1x16x1xf32> to vector<1xf32>
      %33 = vector.shape_cast %32 : vector<1xf32> to vector<1x1x1xf32>
      %34 = vector.extract %33[0, 0, 0] : f32 from vector<1x1x1xf32>
      %35 = vector.broadcast %34 : f32 to vector<1x1xf32>
      %c0_19 = arith.constant 0 : index
      %c0_20 = arith.constant 0 : index
      %36 = vector.load %arg3[%c0_19, %c0_20] : memref<1x1xf32, #tpu.memory_space<vmem>>, vector<1x1xf32>
      tpu.vector_store %arg3[%c0_19, %c0_20], %35 {strides = array<i32>} : memref<1x1xf32, #tpu.memory_space<vmem>>, vector<1x1xf32>,
    } else {
    }
    return
  }
  func.func @transform_0(%arg0: i32) -> (i32, i32) {
    %c0_i32 = arith.constant 0 : i32
    %c0_i32_0 = arith.constant 0 : i32
    return %arg0, %c0_i32 : i32, i32
  }
  func.func @transform_1(%arg0: i32) -> (i32, i32) {
    %c0_i32 = arith.constant 0 : i32
    %c0_i32_0 = arith.constant 0 : i32
    return %arg0, %c0_i32 : i32, i32
  }
  func.func @transform_2(%arg0: i32) -> (i32, i32) {
    %c0_i32 = arith.constant 0 : i32
    %c0_i32_0 = arith.constant 0 : i32
    %c0_i32_1 = arith.constant 0 : i32
    return %c0_i32, %c0_i32_0 : i32, i32
  }
}

</mosaic_0001>

<llo_original>
// kernel: tpu_custom_call.1
$region0: #{tpu_custom_call.1}
  #allocation0 [shape = 'u32[]', space=smem, size = 0x4, offset = 0x4, fixed_abs, tag = 'smem constant byte address 0x4 - core index']
  #allocation1 [shape = 'u32[144,128]{1,0:T(1,128)}', space=vmem, size = 0x12000, scoped, tag = 'internal scratch']
  #allocation2 [shape = 'f32[16,1]{1,0:T(8,128)}', space=vmem, size = 0x2000, scoped, tag = 'scratch operand']
  %s0 = inlined_call_operand.vmem [shape: f32[16,128], index: 0, kind: input, shape index: {}]
  %s1 = inlined_call_operand.vmem [shape: s32[16,1], index: 1, kind: input, shape index: {}]
  %s2 = inlined_call_operand.hbm [shape: f32[1,1], index: 2, kind: output, shape index: {}]
  %s3 = sld [smem:[#allocation0]]
  $region26: #{tpu_custom_call.1} parent=0
    _
  %s5 = ssub.s32 1, %s3
  %s6 = scalar_select 0, %s5, %s3
  $region1: #{tpu_custom_call.1} parent=0
    #allocation3 [shape = 'u8[512]{0}', space=vmem, size = 0x400, scoped, tag = 'output window, operand 0, single buffered']
    #allocation4 [shape = 's32[1]{0}', space=sflag, size = 0x4, scoped, tag = 'scoped memory for tpu_custom_call.1']
    %7 = vsyncpa [#allocation4], 0
    // Predicated region
    $region2: #{tpu_custom_call.1} parent=1 // pred_check
      _
    $region3: #{tpu_custom_call.1} parent=1 // pred_check_branch
      %9 = sbr.rel (0) target = $region5
    $region4: #{tpu_custom_call.1} parent=1 // pred_region
      _
    $region5: #{tpu_custom_call.1} parent=1 // pred_fallthru
      _
    // Predicated region
    $region6: #{tpu_custom_call.1} parent=1 // pred_check
      _
    $region7: #{tpu_custom_call.1} parent=1 // pred_check_branch
      %11 = sbr.rel (0) target = $region9
    $region8: #{tpu_custom_call.1} parent=1 // pred_region
      _
    $region9: #{tpu_custom_call.1} parent=1 // pred_fallthru
      _
    %p12 = scmp.eq.s32.totalorder 0, 0
    // Predicated region
    $region10: #{tpu_custom_call.1} parent=1 // pred_check
      %p13 = pneg %p12
    $region11: #{tpu_custom_call.1} parent=1 // pred_check_branch
      %15 = sbr.rel (%p13) target = $region13
    $region12: #{tpu_custom_call.1} parent=1 // pred_region
      %vm16 = vcmask 7168
      %17 = vst.msk [vmem:[#allocation2] sm:$0xff] %vm16, 0.0
      %18 = vst.msk [vmem:[#allocation2 + $0x8] sm:$0xff] %vm16, 0.0
    $region13: #{tpu_custom_call.1} parent=1 // pred_fallthru
      _
    %v19 = vld [vmem:[%s0] sm:$0xff]
    %v20 = vld [vmem:[%s0 + $0x8] sm:$0xff]
    %v21 = vld [vmem:[%s1] sm:$0xff]
    %v22 = vld [vmem:[%s1 + $0x8] sm:$0xff]
    %v23 = vlaneseq
    %v24 = vand.u32 %v23, 127
    %25 = vset.pattern.permute.xlu0 0
    %26 = vperm.xlu0 %25, %v21
    %v27 = vpop.permute.xlu0 %26
    %28 = vset.pattern.permute.xlu0 0
    %29 = vperm.xlu0 %28, %v22
    %v30 = vpop.permute.xlu0 %29
    %vm31 = vcmp.eq.s32.totalorder %v24, %v27
    %vm32 = vcmp.eq.s32.totalorder %v24, %v30
    %v33 = vsel %vm31, 0.9, 0.0007936508
    %v34 = vsel %vm32, 0.9, 0.0007936508
    %v35 = vmul.f32 %v33, %v19
    %v36 = vmul.f32 %v34, %v20
    %37 = vadd.xlane.f32.xlu0 %v35
    %v38 = vpop.xlane.xlu0 %37
    %39 = vadd.xlane.f32.xlu0 %v36
    %v40 = vpop.xlane.xlu0 %39
    %v41 = vsub.f32 -0.8087112, %v38
    %v42 = vsub.f32 -0.8087112, %v40
    %v43 = vmul.f32 %v19, 0.0007936508
    %v44 = vmul.f32 %v20, 0.0007936508
    %v45 = vadd.f32 %v41, %v43
    %v46 = vadd.f32 %v42, %v44
    %vm47 = vcmp.ne.s32.totalorder %v21, 0
    %vm48 = vcmp.ne.s32.totalorder %v22, 0
    %v49 = vsel %vm47, %v45, 0.0
    %v50 = vsel %vm48, %v46, 0.0
    %v51 = vld [vmem:[#allocation2] sm:$0xff]
    %v52 = vld [vmem:[#allocation2 + $0x8] sm:$0xff]
    %v53 = vadd.f32 %v51, %v49
    %v54 = vadd.f32 %v52, %v50
    %vm55 = vcmask 7168
    %56 = vst.msk [vmem:[#allocation2] sm:$0xff] %vm55, %v53
    %57 = vst.msk [vmem:[#allocation2 + $0x8] sm:$0xff] %vm55, %v54
    // Predicated region
    $region14: #{tpu_custom_call.1} parent=1 // pred_check
      %p58 = pneg %p12
    $region15: #{tpu_custom_call.1} parent=1 // pred_check_branch
      %60 = sbr.rel (%p58) target = $region17
    $region16: #{tpu_custom_call.1} parent=1 // pred_region
      %v61 = vld [vmem:[#allocation2] sm:$0xff]
      %v62 = vld [vmem:[#allocation2 + $0x8] sm:$0xff]
      %v63 = vsel %vm55, %v61, 0.0
      %v64 = vsel %vm55, %v62, 0.0
      %v65 = vadd.f32 %v63, %v64
      %66 = vadd.xlane.f32.xlu0 %v65
      %v67 = vpop.xlane.xlu0 %66
      %v68 = vrot.slane %v67, 4
      %v69 = vadd.f32 %v67, %v68
      %v70 = vrot.slane %v69, 2
      %v71 = vadd.f32 %v69, %v70
      %v72 = vrot.slane %v71, 1
      %v73 = vadd.f32 %v71, %v72
      %s74 = vtos %v73
      %v75 = vstv %s74
      %vm76 = vcmask 0
      %77 = vst.msk [vmem:[#allocation3] sm:$0x1] %vm76, %v75
    $region17: #{tpu_custom_call.1} parent=1 // pred_fallthru
      _
    // Predicated region
    $region18: #{tpu_custom_call.1} parent=1 // pred_check
      _
    $region19: #{tpu_custom_call.1} parent=1 // pred_check_branch
      %79 = sbr.rel (0) target = $region21
    $region20: #{tpu_custom_call.1} parent=1 // pred_region
      %s81 = ssub.s32 16, 16
      %82 = vsyncadd [#allocation4], %s81
      %s84 = sshll.u32 [#allocation3], 4
      %s85 = int_to_ptr.vmem [resolvable:$true] %s84
      %87 = dma.vmem_to_hbm [thread:$0]  %s85, 16, %s2, [#allocation4]
    $region21: #{tpu_custom_call.1} parent=1 // pred_fallthru
      _
    // Predicated region
    $region22: #{tpu_custom_call.1} parent=1 // pred_check
      _
    $region23: #{tpu_custom_call.1} parent=1 // pred_check_branch
      %89 = sbr.rel (0) target = $region25
    $region24: #{tpu_custom_call.1} parent=1 // pred_region
      %90 = dma.done [#allocation4], 16
    $region25: #{tpu_custom_call.1} parent=1 // pred_fallthru
      _
    %91 = vsyncpa [#allocation4], 1

</llo_original>
